<compile_context>
chip_gen: v7x
topology: tpu7x:2x2x1
jax: 0.10.0
libtpu: 0.0.40
codegen_flags: <defaults>
</compile_context>

<pallas_src>
import math

import jax
import jax.numpy as jnp
from jax.experimental import pallas as pl
from jax.experimental.pallas import tpu as pltpu


def _ilayer_kernel(x_ref, w_ref, o_ref):
    # Pure VPU elementwise multiply.  w_ref block is either (Bt, Nt)
    # (channel-folded path) or (1, Nt) (sublane-broadcast path).
    o_ref[...] = x_ref[...] * w_ref[...]


def _cdiv(a, b):
    return -(-a // b)


def _round_up(a, b):
    return _cdiv(a, b) * b


def ilayer_forward(
    x,
    weights,
    *,
    target_block_bytes=8 * 1024 * 1024,   # input bytes per grid step
    max_lane_block=32768,                 # cap on the lane (last-dim) block
    vmem_limit_bytes=48 * 1024 * 1024,
):
    """out = x * weights[None];  x: (B, C, H, W), weights: (C, H, W)."""
    assert x.shape[1:] == weights.shape, "weights must match x's (C, H, W)"
    B = x.shape[0]
    C = weights.shape[0]
    HW = math.prod(weights.shape[1:])
    N = C * HW
    dtype = x.dtype
    itemsize = jnp.dtype(dtype).itemsize
    sub = max(8, 32 // itemsize)          # native sublane tile: 8/16/32 rows
    LANE = 128

    # ---- choose the 2-D (rows, cols) view ----------------------------------
    fold = (B < sub) and (HW >= LANE)
    if fold:
        # Tiny batch: fold channels into the row axis for sublane density.
        rows, cols = B * C, HW
        row_unit = (C * sub) // math.gcd(C, sub)     # lcm(C, sub): keeps row
        x2 = x.reshape(rows, cols)                   # blocks weight-aligned
        w_base = weights.reshape(C, HW)
    else:
        rows, cols = B, N
        row_unit = sub
        x2 = x.reshape(rows, cols)
        w_base = weights.reshape(1, N)

    # ---- lane (last-dim) block: full width if it fits, else big x128 chunk --
    if cols <= max_lane_block:
        Nt = cols                                    # full extent: always legal
    else:
        Nt = max(LANE, (max_lane_block // LANE) * LANE)
    n_col_blocks = _cdiv(cols, Nt)

    # ---- row block: ~target_block_bytes of input per step --------------------
    max_rows = max(row_unit, target_block_bytes // (Nt * itemsize))
    if rows <= max_rows:
        Bt = rows                                    # full extent
    else:
        Bt = max(row_unit, (max_rows // row_unit) * row_unit)

    # v7x megacore: guarantee >= 2 steps on a parallel axis when the whole
    # problem would otherwise collapse to a single block.
    if n_col_blocks == 1 and Bt >= rows and rows >= 2 * row_unit:
        Bt = _round_up(_cdiv(rows, 2), row_unit)
    n_row_blocks = _cdiv(rows, Bt)

    # ---- weights slab --------------------------------------------------------
    if fold:
        # One row-block worth of weights; every row block starts at a multiple
        # of C, so the same slab is correct for all (including clipped) blocks.
        w2 = jnp.tile(w_base, (Bt // C, 1))          # (Bt, HW) -- tiny
        w_block = (Bt, Nt)
    else:
        w2 = w_base                                  # (1, N)
        w_block = (1, Nt)

    # Column axis OUTER, row axis INNER: weights block index depends only on
    # the outer axis -> DMA'd once per column stripe, resident across rows.
    grid = (n_col_blocks, n_row_blocks)

    out2 = pl.pallas_call(
        _ilayer_kernel,
        out_shape=jax.ShapeDtypeStruct((rows, cols), dtype),
        grid=grid,
        in_specs=[
            pl.BlockSpec((Bt, Nt), lambda j, i: (i, j)),
            pl.BlockSpec(w_block, lambda j, i: (0, j)),
        ],
        out_specs=pl.BlockSpec((Bt, Nt), lambda j, i: (i, j)),
        compiler_params=pltpu.CompilerParams(
            dimension_semantics=("parallel", "parallel"),
            vmem_limit_bytes=vmem_limit_bytes,
        ),
        cost_estimate=pl.CostEstimate(
            flops=rows * cols,
            transcendentals=0,
            bytes_accessed=itemsize * (2 * rows * cols + int(w2.size)),
        ),
    )(x2, w2)

    return out2.reshape(x.shape)


def ilayer_reference(x, weights):
    return x * weights[None]


def _make_inputs(key, B, C, H, W):
    kx, kw = jax.random.split(key)
    x = jax.random.normal(kx, (B, C, H, W), dtype=jnp.float32)
    # xavier_uniform-style init for the (C, H, W) parameter.
    fan_in, fan_out = H * W, C * H * W
    limit = math.sqrt(6.0 / (fan_in + fan_out))
    w = jax.random.uniform(kw, (C, H, W), dtype=jnp.float32,
                           minval=-limit, maxval=limit)
    return x, w


if __name__ == "__main__":
    # Spec-consistent small shape: batch=2, c=4, h=w=16  (channel-folded path).
    x, w = _make_inputs(jax.random.PRNGKey(0), 2, 4, 16, 16)
    out = jax.block_until_ready(ilayer_forward(x, w))
    assert out.shape == x.shape
    assert jnp.allclose(out, ilayer_reference(x, w), atol=1e-6, rtol=1e-6)

    # Larger batch: plain (B, N) path with >=2 row blocks (weight residency).
    x2, w2 = _make_inputs(jax.random.PRNGKey(1), 16, 4, 16, 16)
    out2 = jax.block_until_ready(ilayer_forward(x2, w2))
    assert jnp.allclose(out2, ilayer_reference(x2, w2), atol=1e-6, rtol=1e-6)

    # Ragged tails on both grid axes: clipped last blocks, no host pad/slice.
    x3, w3 = _make_inputs(jax.random.PRNGKey(2), 12, 3, 10, 10)
    out3 = jax.block_until_ready(
        ilayer_forward(x3, w3, target_block_bytes=4096, max_lane_block=128))
    assert jnp.allclose(out3, ilayer_reference(x3, w3), atol=1e-6, rtol=1e-6)

    print("KERNEL_OK")
</pallas_src>

<mosaic_0001>
module attributes {stable_mosaic.version = 11 : i64} {
  func.func @_ilayer_kernel(%arg0: i32, %arg1: i32, %arg2: memref<8x256xf32, #tpu.memory_space<vmem>>, %arg3: memref<8x256xf32, #tpu.memory_space<vmem>>, %arg4: memref<8x256xf32, #tpu.memory_space<vmem>>) attributes {dimension_semantics = [#tpu.dimension_semantics<parallel>, #tpu.dimension_semantics<parallel>], iteration_bounds = array<i64: 1, 1>, scalar_prefetch = 0 : i64, scratch_operands = 0 : i64, tpu.core_type = #tpu.core_type<tc>, window_params = [{transform_indices = @transform_0, window_bounds = array<i64: 8, 256>}, {transform_indices = @transform_1, window_bounds = array<i64: 8, 256>}, {transform_indices = @transform_2, window_bounds = array<i64: 8, 256>}]} {
    %c0 = arith.constant 0 : index
    %c0_0 = arith.constant 0 : index
    %0 = vector.load %arg2[%c0, %c0_0] : memref<8x256xf32, #tpu.memory_space<vmem>>, vector<8x256xf32>
    %c0_1 = arith.constant 0 : index
    %c0_2 = arith.constant 0 : index
    %1 = vector.load %arg3[%c0_1, %c0_2] : memref<8x256xf32, #tpu.memory_space<vmem>>, vector<8x256xf32>
    %2 = arith.mulf %0, %1 : vector<8x256xf32>
    %c0_3 = arith.constant 0 : index
    %c0_4 = arith.constant 0 : index
    %3 = vector.load %arg4[%c0_3, %c0_4] : memref<8x256xf32, #tpu.memory_space<vmem>>, vector<8x256xf32>
    tpu.vector_store %arg4[%c0_3, %c0_4], %2 {strides = array<i32>} : memref<8x256xf32, #tpu.memory_space<vmem>>, vector<8x256xf32>,
    return
  }
  func.func @transform_0(%arg0: i32, %arg1: i32) -> (i32, i32) {
    %c0_i32 = arith.constant 0 : i32
    return %arg1, %arg0 : i32, i32
  }
  func.func @transform_1(%arg0: i32, %arg1: i32) -> (i32, i32) {
    %c0_i32 = arith.constant 0 : i32
    %c0_i32_0 = arith.constant 0 : i32
    return %c0_i32, %arg0 : i32, i32
  }
  func.func @transform_2(%arg0: i32, %arg1: i32) -> (i32, i32) {
    %c0_i32 = arith.constant 0 : i32
    return %arg1, %arg0 : i32, i32
  }
}

</mosaic_0001>

<llo_original>
// kernel: tpu_custom_call.1
$region0: #{tpu_custom_call.1}
  #allocation0 [shape = 'u32[]', space=smem, size = 0x4, offset = 0x4, fixed_abs, tag = 'smem constant byte address 0x4 - core index']
  #allocation1 [shape = 'u32[144,128]{1,0:T(1,128)}', space=vmem, size = 0x12000, scoped, tag = 'internal scratch']
  %s0 = inlined_call_operand.hbm [shape: f32[8,256], index: 0, kind: input, shape index: {}]
  %s1 = inlined_call_operand.hbm [shape: f32[8,256], index: 1, kind: input, shape index: {}]
  %s2 = inlined_call_operand.hbm [shape: f32[8,256], index: 2, kind: output, shape index: {}]
  %s3 = sld [smem:[#allocation0]]
  $region26: #{tpu_custom_call.1} parent=0
    _
  %s5 = ssub.s32 1, %s3
  %s6 = scalar_select 0, %s5, %s3
  $region1: #{tpu_custom_call.1} parent=0
    #allocation2 [shape = 'u8[8192]{0}', space=vmem, size = 0x2000, scoped, tag = 'input window, operand 0, single buffered']
    #allocation3 [shape = 's32[1]{0}', space=sflag, size = 0x4, scoped, tag = 'scoped memory for tpu_custom_call.1']
    #allocation4 [shape = 's32[1]{0}', space=sflag, size = 0x4, scoped, tag = 'scoped memory for tpu_custom_call.1']
    #allocation5 [shape = 'u8[8192]{0}', space=vmem, size = 0x2000, scoped, tag = 'input window, operand 1, single buffered']
    #allocation6 [shape = 's32[1]{0}', space=sflag, size = 0x4, scoped, tag = 'scoped memory for tpu_custom_call.1']
    #allocation7 [shape = 'u8[8192]{0}', space=vmem, size = 0x2000, scoped, tag = 'output window, operand 0, single buffered']
    %7 = vsyncpa [#allocation3], 0
    %8 = vsyncpa [#allocation6], 0
    %9 = vsyncpa [#allocation4], 0
    // Predicated region
    $region2: #{tpu_custom_call.1} parent=1 // pred_check
      _
    $region3: #{tpu_custom_call.1} parent=1 // pred_check_branch
      %11 = sbr.rel (0) target = $region5
    $region4: #{tpu_custom_call.1} parent=1 // pred_region
      %s13 = ssub.s32 256, 256
      %14 = vsyncadd [#allocation3], %s13
      %s16 = sshll.u32 [#allocation2], 4
      %s17 = int_to_ptr.vmem [resolvable:$true] %s16
      %19 = dma.hbm_to_vmem [thread:$0]  %s0, 256, %s17, [#allocation3]
    $region5: #{tpu_custom_call.1} parent=1 // pred_fallthru
      _
    // Predicated region
    $region6: #{tpu_custom_call.1} parent=1 // pred_check
      _
    $region7: #{tpu_custom_call.1} parent=1 // pred_check_branch
      %21 = sbr.rel (0) target = $region9
    $region8: #{tpu_custom_call.1} parent=1 // pred_region
      %s23 = ssub.s32 256, 256
      %24 = vsyncadd [#allocation6], %s23
      %s26 = sshll.u32 [#allocation5], 4
      %s27 = int_to_ptr.vmem [resolvable:$true] %s26
      %29 = dma.hbm_to_vmem [thread:$0]  %s1, 256, %s27, [#allocation6]
    $region9: #{tpu_custom_call.1} parent=1 // pred_fallthru
      _
    // Predicated region
    $region10: #{tpu_custom_call.1} parent=1 // pred_check
      _
    $region11: #{tpu_custom_call.1} parent=1 // pred_check_branch
      %31 = sbr.rel (0) target = $region13
    $region12: #{tpu_custom_call.1} parent=1 // pred_region
      %32 = dma.done [#allocation3], 256
    $region13: #{tpu_custom_call.1} parent=1 // pred_fallthru
      _
    // Predicated region
    $region14: #{tpu_custom_call.1} parent=1 // pred_check
      _
    $region15: #{tpu_custom_call.1} parent=1 // pred_check_branch
      %34 = sbr.rel (0) target = $region17
    $region16: #{tpu_custom_call.1} parent=1 // pred_region
      %35 = dma.done [#allocation6], 256
    $region17: #{tpu_custom_call.1} parent=1 // pred_fallthru
      _
    %v36 = vld [vmem:[#allocation2] sm:$0xff]
    %v37 = vld [vmem:[#allocation2 + $0x8] sm:$0xff]
    %v38 = vld [vmem:[#allocation5] sm:$0xff]
    %v39 = vld [vmem:[#allocation5 + $0x8] sm:$0xff]
    %v40 = vmul.f32 %v36, %v38
    %v41 = vmul.f32 %v37, %v39
    %42 = vst [vmem:[#allocation7] sm:$0xff] %v40
    %43 = vst [vmem:[#allocation7 + $0x8] sm:$0xff] %v41
    // Predicated region
    $region18: #{tpu_custom_call.1} parent=1 // pred_check
      _
    $region19: #{tpu_custom_call.1} parent=1 // pred_check_branch
      %45 = sbr.rel (0) target = $region21
    $region20: #{tpu_custom_call.1} parent=1 // pred_region
      %s47 = ssub.s32 256, 256
      %48 = vsyncadd [#allocation4], %s47
      %s50 = sshll.u32 [#allocation7], 4
      %s51 = int_to_ptr.vmem [resolvable:$true] %s50
      %53 = dma.vmem_to_hbm [thread:$0]  %s51, 256, %s2, [#allocation4]
    $region21: #{tpu_custom_call.1} parent=1 // pred_fallthru
      _
    // Predicated region
    $region22: #{tpu_custom_call.1} parent=1 // pred_check
      _
    $region23: #{tpu_custom_call.1} parent=1 // pred_check_branch
      %55 = sbr.rel (0) target = $region25
    $region24: #{tpu_custom_call.1} parent=1 // pred_region
      %56 = dma.done [#allocation4], 256
    $region25: #{tpu_custom_call.1} parent=1 // pred_fallthru
      _
    %57 = vsyncpa [#allocation3], 1
    %58 = vsyncpa [#allocation6], 1
    %59 = vsyncpa [#allocation4], 1

</llo_original>
